<compile_context>
chip_gen: v6e
topology: v6e:2x2x1
jax: 0.10.0
libtpu: 0.0.40
codegen_flags: <defaults>
</compile_context>

<pallas_src>
import jax
import jax.numpy as jnp
from jax.experimental import pallas as pl
from jax.experimental.pallas import tpu as pltpu

LANE = 128
# 1024 rows * 128 lanes * 4 B = 512 KiB per f32 tile; with 1 input + 1 output
# double-buffered that's ~2 MiB resident — comfortably inside scoped VMEM on
# every generation (v7x included).
_TILE_ROWS = 1024


def _copy_kernel(x_ref, o_ref):
    # Identity: ResidualConnectionNone ignores the skip connection.
    o_ref[...] = x_ref[...]


def _copy_through_vmem(x: jax.Array, *, alias_output: bool = True) -> jax.Array:
    """Route one array through a Pallas VMEM identity copy (values preserved)."""
    if x.size == 0:
        return x

    if x.size % LANE == 0:
        # Lane-dense slab: unmasked 128-wide stores, 1-D row grid, auto-pipelined.
        rows = x.size // LANE
        x2 = x.reshape(rows, LANE)
        tn = min(_TILE_ROWS, rows)  # either full rows or 1024 (divisible by 8)
        grid = (pl.cdiv(rows, tn),)
        out = pl.pallas_call(
            _copy_kernel,
            out_shape=jax.ShapeDtypeStruct((rows, LANE), x.dtype),
            grid=grid,
            in_specs=[pl.BlockSpec((tn, LANE), lambda i: (i, 0))],
            out_specs=pl.BlockSpec((tn, LANE), lambda i: (i, 0)),
            input_output_aliases={0: 0} if alias_output else {},
            compiler_params=pltpu.CompilerParams(
                dimension_semantics=("parallel",)),
        )(x2)
        return out.reshape(x.shape)

    # Fallback for odd sizes: whole array resident in VMEM, single invocation.
    out = pl.pallas_call(
        _copy_kernel,
        out_shape=jax.ShapeDtypeStruct(x.shape, x.dtype),
        in_specs=[pl.BlockSpec(memory_space=pltpu.MemorySpace.VMEM)],
        out_specs=pl.BlockSpec(memory_space=pltpu.MemorySpace.VMEM),
        input_output_aliases={0: 0} if alias_output else {},
    )(x)
    return out


def residual_connection_none(h: jax.Array,
                             h_prev: jax.Array,
                             step_idx: int = 0,
                             *,
                             materialize: bool = False,
                             alias_outputs: bool = True):
    """Pallas/JAX implementation of ResidualConnectionNone.forward.

    Default (materialize=False): zero-cost pass-through — returns the inputs
    unchanged, exactly like the PyTorch module (no HBM traffic, no launch).

    materialize=True: each tensor is routed through a Pallas VMEM identity
    copy. With alias_outputs=True the outputs alias the input buffers
    (input_output_aliases), so no new HBM allocation is made; the input
    jax.Arrays are donated and must not be reused by the caller.

    step_idx is accepted for API compatibility and has no effect.
    """
    del step_idx  # unused, same as the reference module
    if not materialize:
        return h, h_prev
    return (_copy_through_vmem(h, alias_output=alias_outputs),
            _copy_through_vmem(h_prev, alias_output=alias_outputs))


if __name__ == "__main__":
    key = jax.random.PRNGKey(0)
    k1, k2 = jax.random.split(key)

    # Small shapes consistent with the module's (..., m) convention.
    N, M = 8, 32
    h = jax.random.normal(k1, (N, M), dtype=jnp.float32)
    h_prev = jax.random.normal(k2, (N, M), dtype=jnp.float32)

    # 1) Fast path (default): true pass-through, zero cost.
    h_out, h_prev_out = residual_connection_none(h, h_prev, step_idx=0)
    assert h_out is h and h_prev_out is h_prev

    # 2) Kernel path (contractual kernel boundary): aliased identity copy.
    #    The aliased inputs are donated, so pass fresh copies and compare the
    #    outputs against the originals we keep.
    h_in = h + 0.0
    h_prev_in = h_prev + 0.0
    hk, hpk = residual_connection_none(
        h_in, h_prev_in, step_idx=0, materialize=True, alias_outputs=True)
    jax.block_until_ready((hk, hpk))

    assert hk.shape == h.shape and hk.dtype == h.dtype
    assert hpk.shape == h_prev.shape and hpk.dtype == h_prev.dtype
    assert jnp.array_equal(hk, h)
    assert jnp.array_equal(hpk, h_prev)

    print("KERNEL_OK")
</pallas_src>

<mosaic_0001>
module attributes {stable_mosaic.version = 11 : i64} {
  func.func @_copy_kernel(%arg0: i32, %arg1: memref<2x128xf32, #tpu.memory_space<vmem>>, %arg2: memref<2x128xf32, #tpu.memory_space<vmem>>) attributes {dimension_semantics = [#tpu.dimension_semantics<parallel>], iteration_bounds = array<i64: 1>, scalar_prefetch = 0 : i64, scratch_operands = 0 : i64, tpu.core_type = #tpu.core_type<tc>, window_params = [{transform_indices = @transform_0, window_bounds = array<i64: 2, 128>}, {transform_indices = @transform_1, window_bounds = array<i64: 2, 128>}]} {
    %c0 = arith.constant 0 : index
    %c0_0 = arith.constant 0 : index
    %0 = vector.load %arg1[%c0, %c0_0] : memref<2x128xf32, #tpu.memory_space<vmem>>, vector<2x128xf32>
    %c0_1 = arith.constant 0 : index
    %c0_2 = arith.constant 0 : index
    %1 = vector.load %arg2[%c0_1, %c0_2] : memref<2x128xf32, #tpu.memory_space<vmem>>, vector<2x128xf32>
    tpu.vector_store %arg2[%c0_1, %c0_2], %0 {strides = array<i32>} : memref<2x128xf32, #tpu.memory_space<vmem>>, vector<2x128xf32>,
    return
  }
  func.func @transform_0(%arg0: i32) -> (i32, i32) {
    %c0_i32 = arith.constant 0 : i32
    %c0_i32_0 = arith.constant 0 : i32
    return %arg0, %c0_i32 : i32, i32
  }
  func.func @transform_1(%arg0: i32) -> (i32, i32) {
    %c0_i32 = arith.constant 0 : i32
    %c0_i32_0 = arith.constant 0 : i32
    return %arg0, %c0_i32 : i32, i32
  }
}

</mosaic_0001>

<llo_original>
// kernel: tpu_custom_call.1
$region0: #{tpu_custom_call.1}
  #allocation0 [shape = 'u32[]', space=smem, size = 0x4, offset = 0x4, fixed_abs, tag = 'smem constant byte address 0x4 - core index']
  #allocation1 [shape = 'u32[144,128]{1,0:T(1,128)}', space=vmem, size = 0x12000, scoped, tag = 'internal scratch']
  %s0 = inlined_call_operand.hbm [shape: f32[2,128], index: 0, kind: input, shape index: {}, may-alias: {0,1}]
  %s1 = inlined_call_operand.hbm [shape: f32[2,128], index: 1, kind: output, shape index: {}, may-alias: {0,1}]
  %s2 = sld [smem:[#allocation0]]
  $region18: #{tpu_custom_call.1} parent=0
    _
  %s4 = ssub.s32 1, %s2
  %s5 = scalar_select 0, %s4, %s2
  $region1: #{tpu_custom_call.1} parent=0
    #allocation2 [shape = 'u8[1024]{0}', space=vmem, size = 0x400, scoped, tag = 'input window, operand 0, single buffered']
    #allocation3 [shape = 's32[1]{0}', space=sflag, size = 0x4, scoped, tag = 'scoped memory for tpu_custom_call.1']
    #allocation4 [shape = 's32[1]{0}', space=sflag, size = 0x4, scoped, tag = 'scoped memory for tpu_custom_call.1']
    #allocation5 [shape = 'u8[1024]{0}', space=vmem, size = 0x400, scoped, tag = 'output window, operand 0, single buffered']
    %6 = vsyncpa [#allocation3], 0
    %7 = vsyncpa [#allocation4], 0
    // Predicated region
    $region2: #{tpu_custom_call.1} parent=1 // pred_check
      _
    $region3: #{tpu_custom_call.1} parent=1 // pred_check_branch
      %9 = sbr.rel (0) target = $region5
    $region4: #{tpu_custom_call.1} parent=1 // pred_region
      %s11 = ssub.s32 32, 32
      %12 = vsyncadd [#allocation3], %s11
      %s14 = sshll.u32 [#allocation2], 4
      %s15 = int_to_ptr.vmem [resolvable:$true] %s14
      %17 = dma.hbm_to_vmem [thread:$0]  %s0, 32, %s15, [#allocation3]
    $region5: #{tpu_custom_call.1} parent=1 // pred_fallthru
      _
    // Predicated region
    $region6: #{tpu_custom_call.1} parent=1 // pred_check
      _
    $region7: #{tpu_custom_call.1} parent=1 // pred_check_branch
      %19 = sbr.rel (0) target = $region9
    $region8: #{tpu_custom_call.1} parent=1 // pred_region
      %20 = dma.done [#allocation3], 32
    $region9: #{tpu_custom_call.1} parent=1 // pred_fallthru
      _
    %v21 = vld [vmem:[#allocation2] sm:$0x3]
    %22 = vst [vmem:[#allocation5] sm:$0x3] %v21
    // Predicated region
    $region10: #{tpu_custom_call.1} parent=1 // pred_check
      _
    $region11: #{tpu_custom_call.1} parent=1 // pred_check_branch
      %24 = sbr.rel (0) target = $region13
    $region12: #{tpu_custom_call.1} parent=1 // pred_region
      %s26 = ssub.s32 32, 32
      %27 = vsyncadd [#allocation4], %s26
      %s29 = sshll.u32 [#allocation5], 4
      %s30 = int_to_ptr.vmem [resolvable:$true] %s29
      %32 = dma.vmem_to_hbm [thread:$0]  %s30, 32, %s1, [#allocation4]
    $region13: #{tpu_custom_call.1} parent=1 // pred_fallthru
      _
    // Predicated region
    $region14: #{tpu_custom_call.1} parent=1 // pred_check
      _
    $region15: #{tpu_custom_call.1} parent=1 // pred_check_branch
      %34 = sbr.rel (0) target = $region17
    $region16: #{tpu_custom_call.1} parent=1 // pred_region
      %35 = dma.done [#allocation4], 32
    $region17: #{tpu_custom_call.1} parent=1 // pred_fallthru
      _
    %36 = vsyncpa [#allocation3], 1
    %37 = vsyncpa [#allocation4], 1

</llo_original>
